<compile_context>
chip_gen: v7x
topology: tpu7x:2x2x1
jax: 0.10.0
libtpu: 0.0.40
codegen_flags: <defaults>
</compile_context>

<pallas_src>
import functools

import jax
import jax.numpy as jnp
from jax.experimental import pallas as pl
from jax.experimental.pallas import tpu as pltpu


def _fused_conv_kernel(x_ref, w_ref, b_ref, o_ref):
    """One fused MXU matmul for the whole convolution.

    x_ref: (K = KH*KW*Cin, M_blk)   im2col taps, lane-dense (M on lanes)
    w_ref: (Cout_t, K)              weights
    b_ref: (Cout_t, 1)              bias (f32)
    o_ref: (Cout_t, M_blk)          conv output, lane-dense (M on lanes)
    """
    acc = jnp.dot(w_ref[...], x_ref[...], preferred_element_type=jnp.float32)
    o_ref[...] = (acc + b_ref[...]).astype(o_ref.dtype)


def upscale_block(x_nchw, weight, bias, *, scale_factor, stride, padding,
                  compute_dtype=jnp.bfloat16):
    """Conv2d(Cin -> Cout*r^2, k, stride, padding) + PixelShuffle(r).

    x_nchw : (N, Cin, H, W)          float32
    weight : (Cout*r^2, Cin, KH, KW) float32  (PyTorch OIHW layout)
    bias   : (Cout*r^2,) or None
    returns: (N, Cout, Ho*r, Wo*r)   float32  (NCHW, like PyTorch)
    """
    N, Cin, H, W = x_nchw.shape
    Cout_t, _, KH, KW = weight.shape
    r = scale_factor
    Cout = Cout_t // (r * r)
    Ho = (H + 2 * padding - KH) // stride + 1
    Wo = (W + 2 * padding - KW) // stride + 1
    HW = Ho * Wo
    T = KH * KW
    K = T * Cin          # fused contraction dim (36 here)
    M = N * HW           # fused row dim (512 here), lands on lanes

    # ---- wrapper-side layout glue: transposed im2col (K, M) ----
    xp = jnp.pad(
        x_nchw, ((0, 0), (0, 0), (padding, padding), (padding, padding))
    )
    taps = []
    for kh in range(KH):
        for kw in range(KW):
            patch = xp[
                :, :,
                kh: kh + stride * (Ho - 1) + 1: stride,
                kw: kw + stride * (Wo - 1) + 1: stride,
            ]  # (N, Cin, Ho, Wo)
            taps.append(patch)
    # (T, N, Cin, Ho, Wo) -> (T, Cin, N, Ho, Wo) -> (K, M); K order = (t, cin)
    x_mat = jnp.stack(taps, axis=0).transpose(0, 2, 1, 3, 4).reshape(K, M)
    x_mat = x_mat.astype(compute_dtype)

    # weights: OIHW -> (O, KH, KW, I) -> (Cout_t, K); same (t, cin) K order
    w_mat = (
        jnp.transpose(weight, (0, 2, 3, 1)).reshape(Cout_t, K)
        .astype(compute_dtype)
    )

    b_col = bias if bias is not None else jnp.zeros((Cout_t,), jnp.float32)
    b_col = b_col.astype(jnp.float32).reshape(Cout_t, 1)

    # ---- M tiling: 2-wide parallel grid (dual-TC occupancy on v7x) when M
    #      splits into 128-lane multiples; otherwise one full-M block. ----
    m_blk = M // 2 if (M % 256 == 0) else M
    grid = (M // m_blk,)

    isz = jnp.dtype(compute_dtype).itemsize
    cost = pl.CostEstimate(
        flops=2 * M * K * Cout_t,
        transcendentals=0,
        bytes_accessed=K * M * isz + Cout_t * K * isz
        + Cout_t * 4 + Cout_t * M * 4,
    )

    out = pl.pallas_call(
        _fused_conv_kernel,
        out_shape=jax.ShapeDtypeStruct((Cout_t, M), jnp.float32),
        grid=grid,
        in_specs=[
            pl.BlockSpec((K, m_blk), lambda i: (0, i)),        # activations
            pl.BlockSpec((Cout_t, K), lambda i: (0, 0)),       # weights
            pl.BlockSpec((Cout_t, 1), lambda i: (0, 0)),       # bias
        ],
        out_specs=pl.BlockSpec((Cout_t, m_blk), lambda i: (0, i)),
        compiler_params=pltpu.CompilerParams(
            dimension_semantics=("parallel",) * len(grid)
        ),
        cost_estimate=cost,
    )(x_mat, w_mat, b_col)

    # ---- wrapper-side layout glue: PixelShuffle (o = c*r^2 + i*r + j) ----
    y = out.reshape(Cout, r, r, N, Ho, Wo)
    y = jnp.transpose(y, (3, 0, 4, 1, 5, 2))      # (N, Cout, Ho, i, Wo, j)
    return y.reshape(N, Cout, Ho * r, Wo * r)


def _reference(x_nchw, weight, bias, *, scale_factor, stride, padding):
    """Pure-JAX reference (lax conv + pixel shuffle) for verification."""
    r = scale_factor
    out = jax.lax.conv_general_dilated(
        x_nchw,
        weight,
        window_strides=(stride, stride),
        padding=[(padding, padding), (padding, padding)],
        dimension_numbers=("NCHW", "OIHW", "NCHW"),
    )
    if bias is not None:
        out = out + bias[None, :, None, None]
    N, Ct, Ho, Wo = out.shape
    Cout = Ct // (r * r)
    out = out.reshape(N, Cout, r, r, Ho, Wo)
    out = jnp.transpose(out, (0, 1, 4, 2, 5, 3))
    return out.reshape(N, Cout, Ho * r, Wo * r)


if __name__ == "__main__":
    # Module config: UpscaleBlock(in_channels=4, out_channels=4, scale_factor=2,
    #                             kernel_size=3, stride=1, padding=1, bias=True)
    in_channels, out_channels = 4, 4
    scale_factor, kernel_size, stride, padding = 2, 3, 1, 1
    N, H, W = 2, 16, 16
    Cout_t = out_channels * scale_factor**2

    key = jax.random.PRNGKey(0)
    kx, kw, kb = jax.random.split(key, 3)
    x = jax.random.normal(kx, (N, in_channels, H, W), dtype=jnp.float32)
    fan_in = in_channels * kernel_size * kernel_size
    weight = jax.random.normal(
        kw, (Cout_t, in_channels, kernel_size, kernel_size), dtype=jnp.float32
    ) / jnp.sqrt(fan_in)
    bias = jax.random.normal(kb, (Cout_t,), dtype=jnp.float32) * 0.01

    ref = _reference(
        x, weight, bias,
        scale_factor=scale_factor, stride=stride, padding=padding,
    )

    # f32-operand path: tight check (proves layout / tap / shuffle math exact).
    fn_f32 = jax.jit(functools.partial(
        upscale_block, scale_factor=scale_factor, stride=stride,
        padding=padding, compute_dtype=jnp.float32,
    ))
    out_f32 = jax.block_until_ready(fn_f32(x, weight, bias))
    assert out_f32.shape == (N, out_channels, H * scale_factor,
                             W * scale_factor), out_f32.shape
    assert jnp.allclose(out_f32, ref, atol=1e-4, rtol=1e-4), float(
        jnp.max(jnp.abs(out_f32 - ref))
    )

    # bf16-operand path (default, MXU-native on v6e/v7x; f32 accumulation).
    fn_bf16 = jax.jit(functools.partial(
        upscale_block, scale_factor=scale_factor, stride=stride,
        padding=padding, compute_dtype=jnp.bfloat16,
    ))
    out_bf16 = jax.block_until_ready(fn_bf16(x, weight, bias))
    assert out_bf16.shape == out_f32.shape, out_bf16.shape
    assert jnp.allclose(out_bf16, ref, atol=3e-2, rtol=3e-2), float(
        jnp.max(jnp.abs(out_bf16 - ref))
    )

    print("KERNEL_OK")
</pallas_src>

<mosaic_0001>
module attributes {stable_mosaic.version = 11 : i64} {
  func.func @_fused_conv_kernel(%arg0: i32, %arg1: memref<36x256xf32, #tpu.memory_space<vmem>>, %arg2: memref<16x36xf32, #tpu.memory_space<vmem>>, %arg3: memref<16x1xf32, #tpu.memory_space<vmem>>, %arg4: memref<16x256xf32, #tpu.memory_space<vmem>>) attributes {dimension_semantics = [#tpu.dimension_semantics<parallel>], iteration_bounds = array<i64: 2>, scalar_prefetch = 0 : i64, scratch_operands = 0 : i64, tpu.core_type = #tpu.core_type<tc>, window_params = [{transform_indices = @transform_0, window_bounds = array<i64: 36, 256>}, {pipeline_mode = #tpu.pipeline_mode<synchronous>, transform_indices = @transform_1, window_bounds = array<i64: 16, 36>}, {pipeline_mode = #tpu.pipeline_mode<synchronous>, transform_indices = @transform_2, window_bounds = array<i64: 16, 1>}, {transform_indices = @transform_3, window_bounds = array<i64: 16, 256>}]} {
    %c0 = arith.constant 0 : index
    %c0_0 = arith.constant 0 : index
    %0 = vector.load %arg2[%c0, %c0_0] : memref<16x36xf32, #tpu.memory_space<vmem>>, vector<16x36xf32>
    %c0_1 = arith.constant 0 : index
    %c0_2 = arith.constant 0 : index
    %1 = vector.load %arg1[%c0_1, %c0_2] : memref<36x256xf32, #tpu.memory_space<vmem>>, vector<36x256xf32>
    %cst = arith.constant dense<0.000000e+00> : vector<16x256xf32>
    %2 = tpu.matmul %0, %1, %cst {dimension_numbers = #tpu.dot_dimension_numbers<[1], [0], [0], [1], [0, 0, 1, 1], [], []>} : vector<16x36xf32>, vector<36x256xf32>, vector<16x256xf32> -> vector<16x256xf32>
    %c0_3 = arith.constant 0 : index
    %c0_4 = arith.constant 0 : index
    %3 = vector.load %arg3[%c0_3, %c0_4] : memref<16x1xf32, #tpu.memory_space<vmem>>, vector<16x1xf32>
    %4 = vector.broadcast %3 : vector<16x1xf32> to vector<16x256xf32>
    %5 = arith.addf %2, %4 : vector<16x256xf32>
    %c0_5 = arith.constant 0 : index
    %c0_6 = arith.constant 0 : index
    %6 = vector.load %arg4[%c0_5, %c0_6] : memref<16x256xf32, #tpu.memory_space<vmem>>, vector<16x256xf32>
    tpu.vector_store %arg4[%c0_5, %c0_6], %5 {strides = array<i32>} : memref<16x256xf32, #tpu.memory_space<vmem>>, vector<16x256xf32>,
    return
  }
  func.func @transform_0(%arg0: i32) -> (i32, i32) {
    %c0_i32 = arith.constant 0 : i32
    %c0_i32_0 = arith.constant 0 : i32
    return %c0_i32, %arg0 : i32, i32
  }
  func.func @transform_1(%arg0: i32) -> (i32, i32) {
    %c0_i32 = arith.constant 0 : i32
    %c0_i32_0 = arith.constant 0 : i32
    %c0_i32_1 = arith.constant 0 : i32
    return %c0_i32, %c0_i32_0 : i32, i32
  }
  func.func @transform_2(%arg0: i32) -> (i32, i32) {
    %c0_i32 = arith.constant 0 : i32
    %c0_i32_0 = arith.constant 0 : i32
    %c0_i32_1 = arith.constant 0 : i32
    return %c0_i32, %c0_i32_0 : i32, i32
  }
  func.func @transform_3(%arg0: i32) -> (i32, i32) {
    %c0_i32 = arith.constant 0 : i32
    %c0_i32_0 = arith.constant 0 : i32
    return %c0_i32, %arg0 : i32, i32
  }
}

</mosaic_0001>

<llo_original>
// kernel: upscale_block.1
$region0: #{upscale_block.1}
  #allocation0 [shape = 'u32[]', space=smem, size = 0x4, offset = 0x4, fixed_abs, tag = 'smem constant byte address 0x4 - core index']
  #allocation1 [shape = 'u32[144,128]{1,0:T(1,128)}', space=vmem, size = 0x12000, scoped, tag = 'internal scratch']
  %s0 = inlined_call_operand.vmem [shape: f32[36,512], index: 0, kind: input, shape index: {}]
  %s1 = inlined_call_operand.vmem [shape: f32[16,36], index: 1, kind: input, shape index: {}]
  %s2 = inlined_call_operand.vmem [shape: f32[16,1], index: 2, kind: input, shape index: {}]
  %s3 = inlined_call_operand.vmem [shape: f32[16,512], index: 3, kind: output, shape index: {}]
  %s4 = sld [smem:[#allocation0]]
  $region87: #{upscale_block.1} parent=0
    _
  %s6 = ssub.s32 1, %s4
  %s7 = scalar_select 0, %s6, %s4
  $region1: #{upscale_block.1} parent=0
    #allocation2 [shape = 'u8[81920]{0}', space=vmem, size = 0x14000, scoped, tag = 'input window, operand 0']
    #allocation3 [shape = 'u8[32768]{0}', space=vmem, size = 0x8000, scoped, tag = 'output window, operand 0']
    loop: start=0, step=1, limit=4
    $region2: #{upscale_block.1} parent=1 // loop_pre_header
      _
    $region3: #{upscale_block.1} parent=1 // loop_header
      %s9 = sphi 0, %s13
      %p10 = scmp.ge.s32.totalorder %s9, 4
      %s19 = sphi 0, %s21
      %s22 = sphi 0, %s19
      %s23 = sphi 0, %s22
      %s39 = sphi 0, %s23
      %s43 = sphi 0, %s43
      %s45 = sphi 0, %s43
      %s46 = sphi 0, %s45
      %s60 = sphi 0, %s46
      %s64 = sphi 0, %s64
      %s66 = sphi 0, %s64
      %s67 = sphi 0, %s66
      %s81 = sphi 0, %s67
      %s87 = sphi 0, %s89
      %s90 = sphi 0, %s87
      %s91 = sphi 0, %s90
      %s107 = sphi 0, %s91
    $region4: #{upscale_block.1} parent=1 // loop_header_branch
      %12 = sbr.rel (%p10) target = $region8
    $region5: #{upscale_block.1} parent=1 // loop_body
      %s14 = ssub.s32 %s9, 1
      %s15 = ssub.s32 %s9, 2
      %s16 = sadd.s32 %s9, 1
      %s17 = ssub.s32 %s9, %s16
      %p18 = scmp.eq.s32.totalorder %s17, 0
      %s20 = sadd.s32 %s19, 1
      %s21 = scalar_select %p18, %s19, %s20
      %p24 = pneg %p18
      %p25 = scmp.eq.s32.totalorder %s9, 1
      %p26 = por %p24, %p25
      %p27 = scmp.ne.s32.totalorder %s19, %s22
      %p28 = scmp.eq.s32.totalorder %s9, 0
      %p29 = por %p27, %p28
      %p30 = scmp.ne.s32.totalorder %s19, %s22
      %p31 = scmp.eq.s32.totalorder %s14, 1
      %p32 = por %p30, %p31
      %p33 = scmp.ne.s32.totalorder %s22, %s23
      %p34 = scmp.eq.s32.totalorder %s14, 0
      %p35 = por %p33, %p34
      %p36 = scmp.ne.s32.totalorder %s22, %s23
      %p37 = scmp.eq.s32.totalorder %s15, 1
      %p38 = por %p36, %p37
      %p40 = scmp.ne.s32.totalorder %s23, %s39
      %p41 = scmp.eq.s32.totalorder %s15, 0
      %p42 = por %p40, %p41
      %s44 = sadd.s32 %s43, 1
      %p47 = scmp.eq.s32.totalorder %s9, 1
      %p48 = scmp.ne.s32.totalorder %s43, %s45
      %p49 = scmp.eq.s32.totalorder %s9, 0
      %p50 = por %p48, %p49
      %p51 = scmp.ne.s32.totalorder %s43, %s45
      %p52 = scmp.eq.s32.totalorder %s14, 1
      %p53 = por %p51, %p52
      %p54 = scmp.ne.s32.totalorder %s45, %s46
      %p55 = scmp.eq.s32.totalorder %s14, 0
      %p56 = por %p54, %p55
      %p57 = scmp.ne.s32.totalorder %s45, %s46
      %p58 = scmp.eq.s32.totalorder %s15, 1
      %p59 = por %p57, %p58
      %p61 = scmp.ne.s32.totalorder %s46, %s60
      %p62 = scmp.eq.s32.totalorder %s15, 0
      %p63 = por %p61, %p62
      %s65 = sadd.s32 %s64, 1
      %p68 = scmp.eq.s32.totalorder %s9, 1
      %p69 = scmp.ne.s32.totalorder %s64, %s66
      %p70 = scmp.eq.s32.totalorder %s9, 0
      %p71 = por %p69, %p70
      %p72 = scmp.ne.s32.totalorder %s64, %s66
      %p73 = scmp.eq.s32.totalorder %s14, 1
      %p74 = por %p72, %p73
      %p75 = scmp.ne.s32.totalorder %s66, %s67
      %p76 = scmp.eq.s32.totalorder %s14, 0
      %p77 = por %p75, %p76
      %p78 = scmp.ne.s32.totalorder %s66, %s67
      %p79 = scmp.eq.s32.totalorder %s15, 1
      %p80 = por %p78, %p79
      %p82 = scmp.ne.s32.totalorder %s67, %s81
      %p83 = scmp.eq.s32.totalorder %s15, 0
      %p84 = por %p82, %p83
      %s85 = ssub.s32 %s9, %s16
      %p86 = scmp.eq.s32.totalorder %s85, 0
      %s88 = sadd.s32 %s87, 1
      %s89 = scalar_select %p86, %s87, %s88
      %p92 = pneg %p86
      %p93 = scmp.eq.s32.totalorder %s9, 1
      %p94 = por %p92, %p93
      %p95 = scmp.ne.s32.totalorder %s87, %s90
      %p96 = scmp.eq.s32.totalorder %s9, 0
      %p97 = por %p95, %p96
      %p98 = scmp.ne.s32.totalorder %s87, %s90
      %p99 = scmp.eq.s32.totalorder %s14, 1
      %p100 = por %p98, %p99
      %p101 = scmp.ne.s32.totalorder %s90, %s91
      %p102 = scmp.eq.s32.totalorder %s14, 0
      %p103 = por %p101, %p102
      %p104 = scmp.ne.s32.totalorder %s90, %s91
      %p105 = scmp.eq.s32.totalorder %s15, 1
      %p106 = por %p104, %p105
      %p108 = scmp.ne.s32.totalorder %s91, %s107
      %p109 = scmp.eq.s32.totalorder %s15, 0
      %p110 = por %p108, %p109
      %p111 = scmp.le.s32.totalorder 1, %s9
      %p112 = scmp.lt.s32.totalorder %s9, 3
      %p113 = pnand %p111, %p112
      %p114 = pneg %p113
      // Predicated region
      $region9: #{upscale_block.1} parent=5 // pred_check
        _
      $region10: #{upscale_block.1} parent=5 // pred_check_branch
        %116 = sbr.rel (%p113) target = $region12
      $region11: #{upscale_block.1} parent=5 // pred_region
        %s117 = ssub.s32 %s9, 1
        // Predicated region
        $region13: #{upscale_block.1} parent=11 // pred_check
          %p118 = pneg %p56
        $region14: #{upscale_block.1} parent=11 // pred_check_branch
          %120 = sbr.rel (%p118) target = $region16
        $region15: #{upscale_block.1} parent=11 // pred_region
          _
        $region16: #{upscale_block.1} parent=11 // pred_fallthru
          _
        // Predicated region
        $region17: #{upscale_block.1} parent=11 // pred_check
          %p121 = pneg %p77
        $region18: #{upscale_block.1} parent=11 // pred_check_branch
          %123 = sbr.rel (%p121) target = $region20
        $region19: #{upscale_block.1} parent=11 // pred_region
          _
        $region20: #{upscale_block.1} parent=11 // pred_fallthru
          _
      $region12: #{upscale_block.1} parent=5 // pred_fallthru
        _
      %p124 = scmp.lt.s32.totalorder %s9, 2
      // Predicated region
      $region21: #{upscale_block.1} parent=5 // pred_check
        %p125 = pneg %p124
      $region22: #{upscale_block.1} parent=5 // pred_check_branch
        %127 = sbr.rel (%p125) target = $region24
      $region23: #{upscale_block.1} parent=5 // pred_region
        // Predicated region
        $region25: #{upscale_block.1} parent=23 // pred_check
          %p128 = pneg %p29
        $region26: #{upscale_block.1} parent=23 // pred_check_branch
          %130 = sbr.rel (%p128) target = $region28
        $region27: #{upscale_block.1} parent=23 // pred_region
          %s131 = sand.u32 %s19, 1
          %s132 = sand.u32 %s19, 1
          %s133 = smul.addr %s132, 80
          %s134 = scalar_lea.vmem [#allocation2], %s133
          %s135 = smul.u32 2, %s9
          %s136 = smul.addr %s135, 8
          %s137 = scalar_lea.vmem %s0, %s136
          // Predicated region
          $region29: #{upscale_block.1} parent=27 // pred_check
            _
          $region30: #{upscale_block.1} parent=27 // pred_check_branch
            %139 = sbr.rel (0) target = $region32
          $region31: #{upscale_block.1} parent=27 // pred_region
            // Predicated region
            $region33: #{upscale_block.1} parent=31 // pred_check
              _
            $region34: #{upscale_block.1} parent=31 // pred_check_branch
              %141 = sbr.rel (0) target = $region36
            $region35: #{upscale_block.1} parent=31 // pred_region
              loop: start=0, step=1, limit=1
              $region37: #{upscale_block.1} parent=35 // loop_pre_header
                _
              $region38: #{upscale_block.1} parent=35 // loop_header
                %s143 = sphi 0, %s147
                %p144 = scmp.ge.s32.totalorder %s143, 1
                %s148 = sphi %s137, %s137
                %s149 = sphi %s134, %s134
              $region39: #{upscale_block.1} parent=35 // loop_header_branch
                %146 = sbr.rel (%p144) target = $region43
              $region40: #{upscale_block.1} parent=35 // loop_body
                %v150 = vld [vmem:[%s148] sm:$0xff]
                %151 = vst [vmem:[%s149] sm:$0xff] %v150
                %v152 = vld [vmem:[%s148 + $0x8] sm:$0xff]
                %153 = vst [vmem:[%s149 + $0x8] sm:$0xff] %v152
                %v154 = vld [vmem:[%s148 + $0x20] sm:$0xff]
                %155 = vst [vmem:[%s149 + $0x10] sm:$0xff] %v154
                %v156 = vld [vmem:[%s148 + $0x28] sm:$0xff]
                %157 = vst [vmem:[%s149 + $0x18] sm:$0xff] %v156
                %v158 = vld [vmem:[%s148 + $0x40] sm:$0xff]
                %159 = vst [vmem:[%s149 + $0x20] sm:$0xff] %v158
                %v160 = vld [vmem:[%s148 + $0x48] sm:$0xff]
                %161 = vst [vmem:[%s149 + $0x28] sm:$0xff] %v160
                %v162 = vld [vmem:[%s148 + $0x60] sm:$0xff]
                %163 = vst [vmem:[%s149 + $0x30] sm:$0xff] %v162
                %v164 = vld [vmem:[%s148 + $0x68] sm:$0xff]
                %165 = vst [vmem:[%s149 + $0x38] sm:$0xff] %v164
                %v166 = vld [vmem:[%s148 + $0x80] sm:$0xff]
                %167 = vst [vmem:[%s149 + $0x40] sm:$0xff] %v166
                %v168 = vld [vmem:[%s148 + $0x88] sm:$0xff]
                %169 = vst [vmem:[%s149 + $0x48] sm:$0xff] %v168
              $region41: #{upscale_block.1} parent=35 // loop_footer
                %s147 = sadd.s32 1, %s143
              $region42: #{upscale_block.1} parent=35 // loop_footer_branch
                %142 = sbr.rel target = $region38
              $region43: #{upscale_block.1} parent=35 // loop_exit
                _
            $region36: #{upscale_block.1} parent=31 // pred_fallthru
              _
            // Predicated region
            $region44: #{upscale_block.1} parent=31 // pred_check
              _
            $region45: #{upscale_block.1} parent=31 // pred_check_branch
              %171 = sbr.rel target = $region47
            $region46: #{upscale_block.1} parent=31 // pred_region
              _
            $region47: #{upscale_block.1} parent=31 // pred_fallthru
              _
          $region32: #{upscale_block.1} parent=27 // pred_fallthru
            _
          %172 = vnop
        $region28: #{upscale_block.1} parent=23 // pred_fallthru
          _
      $region24: #{upscale_block.1} parent=5 // pred_fallthru
        _
      %p173 = scmp.le.s32.totalorder 1, %s9
      %p174 = scmp.lt.s32.totalorder %s9, 3
      %p175 = pnand %p173, %p174
      %p176 = pneg %p175
      // Predicated region
      $region48: #{upscale_block.1} parent=5 // pred_check
        _
      $region49: #{upscale_block.1} parent=5 // pred_check_branch
        %178 = sbr.rel (%p175) target = $region51
      $region50: #{upscale_block.1} parent=5 // pred_region
        %s179 = ssub.s32 %s9, 1
        %s180 = sand.u32 %s22, 1
        %s181 = sand.u32 %s22, 1
        %s182 = smul.addr %s181, 80
        %s183 = scalar_lea.vmem [#allocation2], %s182
        // Predicated region
        $region52: #{upscale_block.1} parent=50 // pred_check
          %p184 = pneg %p35
        $region53: #{upscale_block.1} parent=50 // pred_check_branch
          %186 = sbr.rel (%p184) target = $region55
        $region54: #{upscale_block.1} parent=50 // pred_region
          _
        $region55: #{upscale_block.1} parent=50 // pred_fallthru
          _
        %s187 = sand.u32 %s22, 1
        %s188 = sand.u32 %s22, 1
        %s189 = smul.addr %s188, 80
        %s190 = scalar_lea.vmem [#allocation2], %s189
        %p191 = pneg %p35
        %p192 = pneg %p32
        %p193 = pneg %p56
        %p194 = pneg %p53
        %p195 = pneg %p77
        %p196 = pneg %p74
        %p197 = pneg %p103
        %p198 = pneg %p100
        %s199 = sand.u32 %s90, 1
        %s200 = sand.u32 %s90, 1
        %s201 = smul.addr %s200, 32
        %s202 = scalar_lea.vmem [#allocation3], %s201
        %s203 = smul.u32 2, %s14
        %s204 = smul.u32 2, %s14
        %v205 = vld [vmem:[%s1] sm:$0xff]
        %v206 = vld [vmem:[%s1 + $0x8] sm:$0xff]
        %v207 = vld [vmem:[%s183] sm:$0xff]
        %v208 = vld [vmem:[%s183 + $0x8] sm:$0xff]
        %v209 = vld [vmem:[%s183 + $0x10] sm:$0xff]
        %v210 = vld [vmem:[%s183 + $0x18] sm:$0xff]
        %v211 = vld [vmem:[%s183 + $0x20] sm:$0xff]
        %v212 = vld [vmem:[%s183 + $0x28] sm:$0xff]
        %v213 = vld [vmem:[%s183 + $0x30] sm:$0xff]
        %v214 = vld [vmem:[%s183 + $0x38] sm:$0xff]
        %v215 = vld [vmem:[%s183 + $0x40] sm:$0xf]
        %v216 = vld [vmem:[%s183 + $0x48] sm:$0xf]
        %v217 = vld [vmem:[%s2] sm:$0xff]
        %v218 = vld [vmem:[%s2 + $0x8] sm:$0xff]
        %220 = vset.pattern.permute.xlu0 0
        %221 = vperm.xlu0 %220, %v217
        %v222 = vpop.permute.xlu0 %221
        %225 = vset.pattern.permute.xlu0 0
        %226 = vperm.xlu0 %225, %v218
        %v227 = vpop.permute.xlu0 %226
        %vm229 = vcmask 293888
        %v231 = vsel %vm229, %v205, 0
        %v234 = vsel %vm229, %v206, 0
        %vm236 = vcmask 1043456
        %v238 = vsel %vm236, %v215, 0
        %v241 = vsel %vm236, %v216, 0
        %243 = vmatprep.subr.mxu0 %v208
        %244 = vmatpush1.msra.mxu0 %v207
        %245 = vmatprep.subr.mxu0 %v210
        %246 = vmatpush1.msra.mxu0 %v209
        %247 = vmatprep.subr.mxu0 %v212
        %248 = vmatpush1.msra.mxu0 %v211
        %249 = vmatprep.subr.mxu0 %v214
        %250 = vmatpush1.msra.mxu0 %v213
        %251 = vmatprep.subr.mxu0 %v241
        %252 = vmatpush1.msra.mxu0 %v238
        %253 = vmatprep.subr.mxu0 0.0
        %254 = vmatpush1.msra.mxu0 0.0
        %255 = vmatprep.subr.mxu0 0.0
        %256 = vmatpush1.msra.mxu0 0.0
        %257 = vmatprep.subr.mxu0 0.0
        %258 = vmatpush1.msra.mxu0 0.0
        %259 = vmatprep.subr.mxu0 0.0
        %260 = vmatpush1.msra.mxu0 0.0
        %261 = vmatprep.subr.mxu0 0.0
        %262 = vmatpush1.msra.mxu0 0.0
        %263 = vmatprep.subr.mxu0 0.0
        %264 = vmatpush1.msra.mxu0 0.0
        %265 = vmatprep.subr.mxu0 0.0
        %266 = vmatpush1.msra.mxu0 0.0
        %267 = vmatprep.subr.mxu0 0.0
        %268 = vmatpush1.msra.mxu0 0.0
        %269 = vmatprep.subr.mxu0 0.0
        %270 = vmatpush1.msra.mxu0 0.0
        %271 = vmatprep.subr.mxu0 0.0
        %272 = vmatpush1.msra.mxu0 0.0
        %273 = vmatprep.subr.mxu0 0.0
        %274 = vmatpush1.msra.mxu0 0.0
        %275 = vmatprep.subr.mxu0 0.0
        %276 = vmatpush1.msra.mxu0 0.0
        %277 = vmatprep.subr.mxu0 0.0
        %278 = vmatpush1.msra.mxu0 0.0
        %279 = vmatprep.subr.mxu0 0.0
        %280 = vmatpush1.msra.mxu0 0.0
        %281 = vmatprep.subr.mxu0 0.0
        %282 = vmatpush1.msra.mxu0 0.0
        %283 = vmatprep.subr.mxu0 0.0
        %284 = vmatpush1.msra.mxu0 0.0
        %285 = vmatprep.subr.mxu0 0.0
        %286 = vmatpush1.msra.mxu0 0.0
        %287 = vmatprep.subr.mxu0 0.0
        %288 = vmatpush1.msra.mxu0 0.0
        %289 = vmatprep.subr.mxu0 0.0
        %290 = vmatpush1.msra.mxu0 0.0
        %291 = vmatprep.subr.mxu0 0.0
        %292 = vmatpush1.msra.mxu0 0.0
        %293 = vmatprep.subr.mxu0 0.0
        %294 = vmatpush1.msra.mxu0 0.0
        %295 = vmatprep.subr.mxu0 0.0
        %296 = vmatpush1.msra.mxu0 0.0
        %297 = vmatprep.subr.mxu0 0.0
        %298 = vmatpush1.msra.mxu0 0.0
        %299 = vmatprep.subr.mxu0 0.0
        %300 = vmatpush1.msra.mxu0 0.0
        %301 = vmatprep.subr.mxu0 0.0
        %302 = vmatpush1.msra.mxu0 0.0
        %303 = vmatprep.subr.mxu0 0.0
        %304 = vmatpush1.msra.mxu0 0.0
        %305 = vmatprep.subr.mxu0 0.0
        %306 = vmatpush1.msra.mxu0 0.0
        %307 = vmatprep.mubr.f32.mxu0 0.0
        %308 = vmatmul.mubr.f32.gmra.mrb[0].mxu0 %v231
        %v309 = vpop.f32.mrb[0].mxu0
        %v310 = vadd.f32 %v222, %v309
        %v311 = vpop.f32.mrb[0].mxu0
        %v312 = vadd.f32 %v222, %v311
        %313 = vmatprep.mubr.f32.mxu0 0.0
        %314 = vmatmul.mubr.f32.gmra.mrb[0].mxu0 %v234
        %v315 = vpop.f32.mrb[0].mxu0
        %v316 = vadd.f32 %v227, %v315
        %v317 = vpop.f32.mrb[0].mxu0
        %v318 = vadd.f32 %v227, %v317
        %319 = vdwg.mxu0
        %320 = vst [vmem:[%s202] sm:$0xff] %v310
        %321 = vst [vmem:[%s202 + $0x8] sm:$0xff] %v312
        %322 = vst [vmem:[%s202 + $0x10] sm:$0xff] %v316
        %323 = vst [vmem:[%s202 + $0x18] sm:$0xff] %v318
        %s324 = sand.u32 %s90, 1
        %s325 = sand.u32 %s90, 1
        %s326 = smul.addr %s325, 32
        %s327 = scalar_lea.vmem [#allocation3], %s326
        // Predicated region
        $region56: #{upscale_block.1} parent=50 // pred_check
          %p328 = pneg %p100
        $region57: #{upscale_block.1} parent=50 // pred_check_branch
          %330 = sbr.rel (%p328) target = $region59
        $region58: #{upscale_block.1} parent=50 // pred_region
          %s331 = smul.u32 2, %s14
          %s332 = smul.addr %s331, 8
          %s333 = scalar_lea.vmem %s3, %s332
          // Predicated region
          $region60: #{upscale_block.1} parent=58 // pred_check
            _
          $region61: #{upscale_block.1} parent=58 // pred_check_branch
            %335 = sbr.rel (0) target = $region63
          $region62: #{upscale_block.1} parent=58 // pred_region
            // Predicated region
            $region64: #{upscale_block.1} parent=62 // pred_check
              _
            $region65: #{upscale_block.1} parent=62 // pred_check_branch
              %337 = sbr.rel (0) target = $region67
            $region66: #{upscale_block.1} parent=62 // pred_region
              loop: start=0, step=1, limit=1
              $region68: #{upscale_block.1} parent=66 // loop_pre_header
                _
              $region69: #{upscale_block.1} parent=66 // loop_header
                %s339 = sphi 0, %s343
                %p340 = scmp.ge.s32.totalorder %s339, 1
                %s344 = sphi %s327, %s327
                %s345 = sphi %s333, %s333
              $region70: #{upscale_block.1} parent=66 // loop_header_branch
                %342 = sbr.rel (%p340) target = $region74
              $region71: #{upscale_block.1} parent=66 // loop_body
                %v346 = vld [vmem:[%s344] sm:$0xff]
                %347 = vst [vmem:[%s345] sm:$0xff] %v346
                %v348 = vld [vmem:[%s344 + $0x8] sm:$0xff]
                %349 = vst [vmem:[%s345 + $0x8] sm:$0xff] %v348
                %v350 = vld [vmem:[%s344 + $0x10] sm:$0xff]
                %351 = vst [vmem:[%s345 + $0x20] sm:$0xff] %v350
                %v352 = vld [vmem:[%s344 + $0x18] sm:$0xff]
                %353 = vst [vmem:[%s345 + $0x28] sm:$0xff] %v352
              $region72: #{upscale_block.1} parent=66 // loop_footer
                %s343 = sadd.s32 1, %s339
              $region73: #{upscale_block.1} parent=66 // loop_footer_branch
                %338 = sbr.rel target = $region69
              $region74: #{upscale_block.1} parent=66 // loop_exit
                _
            $region67: #{upscale_block.1} parent=62 // pred_fallthru
              _
            // Predicated region
            $region75: #{upscale_block.1} parent=62 // pred_check
              _
            $region76: #{upscale_block.1} parent=62 // pred_check_branch
              %355 = sbr.rel target = $region78
            $region77: #{upscale_block.1} parent=62 // pred_region
              _
            $region78: #{upscale_block.1} parent=62 // pred_fallthru
              _
          $region63: #{upscale_block.1} parent=58 // pred_fallthru
            _
          %356 = vnop
        $region59: #{upscale_block.1} parent=50 // pred_fallthru
          _
      $region51: #{upscale_block.1} parent=5 // pred_fallthru
        _
      %p357 = scmp.le.s32.totalorder 2, %s9
      // Predicated region
      $region79: #{upscale_block.1} parent=5 // pred_check
        %p358 = pneg %p357
      $region80: #{upscale_block.1} parent=5 // pred_check_branch
        %360 = sbr.rel (%p358) target = $region82
      $region81: #{upscale_block.1} parent=5 // pred_region
        %s361 = ssub.s32 %s9, 2
        // Predicated region
        $region83: #{upscale_block.1} parent=81 // pred_check
          %p362 = pneg %p106
        $region84: #{upscale_block.1} parent=81 // pred_check_branch
          %364 = sbr.rel (%p362) target = $region86
        $region85: #{upscale_block.1} parent=81 // pred_region
          %s365 = sand.u32 %s91, 1
          %s366 = sand.u32 %s91, 1
          %s367 = smul.addr %s366, 32
          %s368 = scalar_lea.vmem [#allocation3], %s367
        $region86: #{upscale_block.1} parent=81 // pred_fallthru
          _
      $region82: #{upscale_block.1} parent=5 // pred_fallthru
        _
    $region6: #{upscale_block.1} parent=1 // loop_footer
      %s13 = sadd.s32 1, %s9
    $region7: #{upscale_block.1} parent=1 // loop_footer_branch
      %8 = sbr.rel target = $region3
    $region8: #{upscale_block.1} parent=1 // loop_exit
      _

</llo_original>
